<compile_context>
chip_gen: v7x
topology: tpu7x:2x2x1
jax: 0.10.0
libtpu: 0.0.40
codegen_flags: <defaults>
</compile_context>

<pallas_src>
import functools

import jax
import jax.numpy as jnp
from jax import lax
from jax.experimental import pallas as pl
from jax.experimental.pallas import tpu as pltpu


# ---------------------------------------------------------------------------
# Small helpers
# ---------------------------------------------------------------------------
def _round_up(x, m):
    return (x + m - 1) // m * m


def _cdiv(a, b):
    return (a + b - 1) // b


def _tpu_vmem_capacity():
    try:
        return int(pltpu.get_tpu_info().vmem_capacity_bytes)
    except Exception:
        return 64 * 1024 * 1024          # conservative (v7x-sized) fallback


def _vmem_plan():
    cap = _tpu_vmem_capacity()
    tile_budget = int(cap * 0.40)                                   # what tiles may occupy
    vmem_limit = max(32 << 20, min(int(cap * 0.70), 100 << 20))     # scoped VMEM limit
    return tile_budget, vmem_limit


def _spec(shape, index_map, buffers=None):
    """BlockSpec with an optional pipeline-depth hint; falls back if unsupported."""
    if buffers is not None:
        try:
            return pl.BlockSpec(shape, index_map, pipeline_mode=pl.Buffered(buffers))
        except Exception:
            pass
    return pl.BlockSpec(shape, index_map)


# ---------------------------------------------------------------------------
# Path A: fused in-kernel im2col (stride == 1)
# ---------------------------------------------------------------------------
def _gated_conv_direct_kernel(x_hbm, w_ref, b_ref, o_ref, buf, sem, *,
                              kh, kw, th, ow, stride, dilation, rows_in,
                              c_pad, oc_pad, activation):
    n = pl.program_id(0)
    t = pl.program_id(1)
    n_tiles = pl.num_programs(1)
    total = pl.num_programs(0) * n_tiles
    step = n * n_tiles + t
    slot = lax.rem(step, 2)

    def _start(src_n, src_t, buf_slot):
        row0 = src_t * (th * stride)
        pltpu.make_async_copy(x_hbm.at[src_n, pl.ds(row0, rows_in)],
                              buf.at[buf_slot], sem.at[buf_slot]).start()

    @pl.when(step == 0)
    def _():                                   # first tile: nothing was prefetched yet
        _start(n, t, slot)

    # Wait for this tile's input rows (descriptor only needs a matching shape).
    pltpu.make_async_copy(x_hbm.at[0, pl.ds(0, rows_in)],
                          buf.at[slot], sem.at[slot]).wait()

    @pl.when(step + 1 < total)                 # prefetch the next tile into the other slot
    def _():
        nxt_t = jnp.where(t + 1 < n_tiles, t + 1, 0)
        nxt_n = jnp.where(t + 1 < n_tiles, n, n + 1)
        _start(nxt_n, nxt_t, 1 - slot)

    # In-register im2col: accumulate KH*KW shifted (TH*OW, C) x (C, 2*OC_pad) matmuls.
    tile = buf[slot]                           # (rows_in, wp, c_pad)
    acc = jnp.zeros((th * ow, 2 * oc_pad), jnp.float32)
    for i in range(kh):
        for j in range(kw):
            patch = tile[i * dilation:i * dilation + th,
                         j * dilation:j * dilation + ow, :]
            patch = patch.reshape(th * ow, c_pad)
            acc = acc + jnp.dot(patch, w_ref[i * kw + j],
                                preferred_element_type=jnp.float32)
    acc = acc + b_ref[...].astype(jnp.float32)

    h = acc[:, :oc_pad]                        # 128-aligned lane split -> cheap
    g = acc[:, oc_pad:]
    if activation is not None:
        h = activation(h)
    out = h * jax.nn.sigmoid(g)
    o_ref[...] = out.reshape(1, th, ow, oc_pad).astype(o_ref.dtype)


def _gated_conv2d_direct(x, w_h, b_h, w_g, b_g, *, padding, dilation,
                         activation, matmul_dtype, out_dtype):
    n, c, hh, ww = x.shape
    oc, _, kh, kw = w_h.shape
    stride = 1

    in_dt = matmul_dtype
    in_bytes = jnp.dtype(in_dt).itemsize
    out_bytes = jnp.dtype(out_dtype).itemsize

    oh = (hh + 2 * padding - dilation * (kh - 1) - 1) // stride + 1
    ow = (ww + 2 * padding - dilation * (kw - 1) - 1) // stride + 1
    c_pad = _round_up(c, 8)            # contraction dim: sublane alignment only
    oc_pad = _round_up(oc, 128)        # lane-dense output / weight tiles
    hp = hh + 2 * padding
    wp = ww + 2 * padding

    budget, vmem_limit = _vmem_plan()

    def rows_needed(t):
        return (t - 1) * stride + dilation * (kh - 1) + 1

    def footprint(t):
        return (2 * rows_needed(t) * wp * c_pad * in_bytes          # dbl-buffered row window
                + 2 * kh * kw * c_pad * 2 * oc_pad * in_bytes       # fused weights (<=2 bufs)
                + 2 * 2 * oc_pad * 4                                 # bias
                + 2 * t * ow * oc_pad * out_bytes                    # pipelined output tile
                + t * ow * 2 * oc_pad * 4)                           # f32 accumulator value

    th = max(1, min(oh, max(1, 1024 // max(ow, 1))))
    while th > 1 and n * _cdiv(oh, th) < 8:    # keep >= 8 grid steps where possible
        th = max(1, th // 2)
    while th > 1 and footprint(th) > budget:
        th = max(1, th // 2)

    n_tiles = _cdiv(oh, th)
    oh_pad = n_tiles * th
    rows_in = rows_needed(th)
    hp_pad = max(hp, (n_tiles - 1) * th * stride + rows_in)   # keep the last DMA in bounds

    # Padded NHWC input, created directly in the matmul dtype (bf16 by default).
    xn = jnp.transpose(x, (0, 2, 3, 1)).astype(in_dt)          # (N, H, W, C)
    xp = jnp.pad(xn, ((0, 0),
                      (padding, hp_pad - hh - padding),
                      (padding, padding),
                      (0, c_pad - c)))

    # Fused per-tap weights (KH*KW, C_pad, 2*OC_pad) and bias (1, 2*OC_pad).
    wh_t = jnp.transpose(w_h, (2, 3, 1, 0)).reshape(kh * kw, c, oc)
    wg_t = jnp.transpose(w_g, (2, 3, 1, 0)).reshape(kh * kw, c, oc)
    w_taps = jnp.zeros((kh * kw, c_pad, 2 * oc_pad), in_dt)
    w_taps = w_taps.at[:, :c, :oc].set(wh_t.astype(in_dt))
    w_taps = w_taps.at[:, :c, oc_pad:oc_pad + oc].set(wg_t.astype(in_dt))
    b_cat = jnp.zeros((1, 2 * oc_pad), jnp.float32)
    b_cat = b_cat.at[0, :oc].set(b_h.astype(jnp.float32))
    b_cat = b_cat.at[0, oc_pad:oc_pad + oc].set(b_g.astype(jnp.float32))

    kernel = functools.partial(
        _gated_conv_direct_kernel, kh=kh, kw=kw, th=th, ow=ow, stride=stride,
        dilation=dilation, rows_in=rows_in, c_pad=c_pad, oc_pad=oc_pad,
        activation=activation)

    m_rows = n * oh_pad * ow
    cost = pl.CostEstimate(
        flops=2 * m_rows * (c_pad * kh * kw) * (2 * oc_pad),
        transcendentals=m_rows * oc_pad * (2 if activation is not None else 1),
        bytes_accessed=int(xp.size * in_bytes + w_taps.size * in_bytes
                           + b_cat.size * 4 + m_rows * oc_pad * out_bytes))
    cparams = pltpu.CompilerParams(
        # The in-kernel prefetch of the next row window assumes sequential grid
        # traversal, so both axes stay "arbitrary" (kernel is HBM-BW bound anyway).
        dimension_semantics=("arbitrary", "arbitrary"),
        vmem_limit_bytes=vmem_limit)

    def run(pipelined):
        in_specs = [
            pl.BlockSpec(memory_space=pl.ANY),                 # padded input stays in HBM
            _spec((kh * kw, c_pad, 2 * oc_pad), lambda b, t: (0, 0, 0),
                  buffers=1 if pipelined else None),           # resident fused weights
            _spec((1, 2 * oc_pad), lambda b, t: (0, 0),
                  buffers=1 if pipelined else None),           # resident fused bias
        ]
        return pl.pallas_call(
            kernel,
            out_shape=jax.ShapeDtypeStruct((n, oh_pad, ow, oc_pad), out_dtype),
            grid=(n, n_tiles),
            in_specs=in_specs,
            out_specs=pl.BlockSpec((1, th, ow, oc_pad), lambda b, t: (b, t, 0, 0)),
            scratch_shapes=[
                pltpu.VMEM((2, rows_in, wp, c_pad), in_dt),    # double-buffered row window
                pltpu.SemaphoreType.DMA((2,)),
            ],
            compiler_params=cparams,
            cost_estimate=cost,
        )(xp, w_taps, b_cat)

    try:
        out_nhwc = run(True)
    except Exception:
        out_nhwc = run(False)       # installed JAX rejected the pipeline_mode hints

    # TODO(synk): keep the model NHWC end-to-end so this de-pad + transpose pass goes away.
    return out_nhwc[:, :oh, :, :oc].transpose(0, 3, 1, 2)


# ---------------------------------------------------------------------------
# Path B: host-side im2col + fused gated matmul (general stride fallback)
# ---------------------------------------------------------------------------
def _gated_conv_matmul_kernel(p_ref, w_ref, b_ref, o_ref, *, oc_pad, activation):
    hg = jnp.dot(p_ref[...], w_ref[...], preferred_element_type=jnp.float32)
    hg = hg + b_ref[...].astype(jnp.float32)
    h = hg[:, :oc_pad]
    g = hg[:, oc_pad:]
    if activation is not None:
        h = activation(h)
    o_ref[...] = (h * jax.nn.sigmoid(g)).astype(o_ref.dtype)


def _im2col(x, kh, kw, stride, padding, dilation):
    """NCHW -> (N*OH*OW, C*KH*KW) patch matrix, reduce-dim ordered (C, KH, KW)."""
    n, c, hh, ww = x.shape
    oh = (hh + 2 * padding - dilation * (kh - 1) - 1) // stride + 1
    ow = (ww + 2 * padding - dilation * (kw - 1) - 1) // stride + 1
    xp = jnp.pad(x, ((0, 0), (0, 0), (padding, padding), (padding, padding)))
    cols = []
    for i in range(kh):
        for j in range(kw):
            r0 = i * dilation
            c0 = j * dilation
            cols.append(xp[:, :, r0:r0 + stride * oh:stride,
                              c0:c0 + stride * ow:stride])               # (n, c, oh, ow)
    patches = jnp.stack(cols, axis=2)                                     # (n, c, kh*kw, oh, ow)
    patches = patches.transpose(0, 3, 4, 1, 2).reshape(n * oh * ow, c * kh * kw)
    return patches, oh, ow


def _gated_conv2d_matmul(x, w_h, b_h, w_g, b_g, *, stride, padding, dilation,
                         activation, matmul_dtype, out_dtype, block_m=1024):
    n, c, _, _ = x.shape
    oc, _, kh, kw = w_h.shape
    in_dt = matmul_dtype
    in_bytes = jnp.dtype(in_dt).itemsize
    out_bytes = jnp.dtype(out_dtype).itemsize

    # Cast at the source so the big (M, K) patch matrix is never materialized in f32.
    patches, oh, ow = _im2col(x.astype(in_dt), kh, kw, stride, padding, dilation)
    m, k = patches.shape

    sub = 16 if in_bytes == 2 else 8
    k_pad = _round_up(k, sub)          # sublane alignment only; NOT padded to 128
    oc_pad = _round_up(oc, 128)        # lane-dense output / weight tiles

    wh_mat = w_h.reshape(oc, k).T.astype(in_dt)
    wg_mat = w_g.reshape(oc, k).T.astype(in_dt)
    w_cat = jnp.zeros((k_pad, 2 * oc_pad), in_dt)
    w_cat = w_cat.at[:k, :oc].set(wh_mat)
    w_cat = w_cat.at[:k, oc_pad:oc_pad + oc].set(wg_mat)
    b_cat = jnp.zeros((1, 2 * oc_pad), jnp.float32)
    b_cat = b_cat.at[0, :oc].set(b_h.astype(jnp.float32))
    b_cat = b_cat.at[0, oc_pad:oc_pad + oc].set(b_g.astype(jnp.float32))

    budget, vmem_limit = _vmem_plan()

    def footprint(t):
        return (3 * t * k_pad * in_bytes                    # P tiles (up to 3 buffers)
                + 2 * t * oc_pad * out_bytes                # output tile (2 buffers)
                + 2 * k_pad * 2 * oc_pad * in_bytes         # fused weights (<= 2 buffers)
                + 2 * 2 * oc_pad * 4)                       # bias

    tm = max(8, _round_up(min(block_m, m), 8))
    tm = min(tm, max(8, _round_up(_cdiv(m, 8), 8)))         # keep >= 8 grid steps
    while tm > 8 and footprint(tm) > budget:
        tm = max(8, _round_up(tm // 2, 8))

    m_pad = _round_up(m, tm)
    p = jnp.pad(patches, ((0, m_pad - m), (0, k_pad - k)))

    kernel = functools.partial(_gated_conv_matmul_kernel, oc_pad=oc_pad,
                               activation=activation)
    cost = pl.CostEstimate(
        flops=2 * m_pad * k_pad * 2 * oc_pad,
        transcendentals=m_pad * oc_pad * (2 if activation is not None else 1),
        bytes_accessed=int(p.size * in_bytes + w_cat.size * in_bytes
                           + b_cat.size * 4 + m_pad * oc_pad * out_bytes))
    cparams = pltpu.CompilerParams(dimension_semantics=("parallel",),
                                   vmem_limit_bytes=vmem_limit)

    def run(pipelined):
        in_specs = [
            _spec((tm, k_pad), lambda i: (i, 0), buffers=3 if pipelined else None),
            _spec((k_pad, 2 * oc_pad), lambda i: (0, 0), buffers=1 if pipelined else None),
            _spec((1, 2 * oc_pad), lambda i: (0, 0), buffers=1 if pipelined else None),
        ]
        return pl.pallas_call(
            kernel,
            out_shape=jax.ShapeDtypeStruct((m_pad, oc_pad), out_dtype),
            grid=(m_pad // tm,),
            in_specs=in_specs,
            out_specs=pl.BlockSpec((tm, oc_pad), lambda i: (i, 0)),
            compiler_params=cparams,
            cost_estimate=cost,
        )(p, w_cat, b_cat)

    try:
        out_flat = run(True)
    except Exception:
        out_flat = run(False)

    # TODO(synk): fuse this de-pad slice + NHWC->NCHW transpose into the consumer.
    return out_flat[:m, :oc].reshape(n, oh, ow, oc).transpose(0, 3, 1, 2)


# ---------------------------------------------------------------------------
# Public entry point
# ---------------------------------------------------------------------------
def gated_conv2d(x, w_h, b_h, w_g, b_g, *, stride=1, padding=0, dilation=1,
                 activation=None, matmul_dtype=jnp.bfloat16, out_dtype=None,
                 block_m=1024):
    """GatedConv2d forward: (activation(conv_h(x)) if activation else conv_h(x)) * sigmoid(conv_g(x)).

    x: (N, C, H, W); w_*: (OC, C, KH, KW); b_*: (OC,). Returns (N, OC, OH, OW).
    matmul_dtype: MXU operand dtype (accumulation is always f32).
    out_dtype:    kernel output dtype (default: x.dtype).
    """
    if out_dtype is None:
        out_dtype = x.dtype
    if matmul_dtype is None:
        matmul_dtype = x.dtype
    common = dict(padding=padding, dilation=dilation, activation=activation,
                  matmul_dtype=matmul_dtype, out_dtype=out_dtype)
    if stride == 1:
        try:
            return _gated_conv2d_direct(x, w_h, b_h, w_g, b_g, **common)
        except Exception:
            # TODO(synk): if the fused in-kernel-im2col path is rejected by the installed
            # Pallas/Mosaic, transparently fall back to the im2col + matmul path.
            pass
    return _gated_conv2d_matmul(x, w_h, b_h, w_g, b_g, stride=stride,
                                block_m=block_m, **common)


# ---------------------------------------------------------------------------
# Pure-JAX reference (for correctness checks)
# ---------------------------------------------------------------------------
def _reference(x, w_h, b_h, w_g, b_g, *, stride, padding, dilation, activation):
    dn = jax.lax.conv_dimension_numbers(x.shape, w_h.shape, ("NCHW", "OIHW", "NCHW"))
    conv = lambda w: jax.lax.conv_general_dilated(
        x, w, window_strides=(stride, stride),
        padding=[(padding, padding), (padding, padding)],
        rhs_dilation=(dilation, dilation), dimension_numbers=dn)
    h = conv(w_h) + b_h.reshape(1, -1, 1, 1)
    g = conv(w_g) + b_g.reshape(1, -1, 1, 1)
    if activation is not None:
        h = activation(h)
    return h * jax.nn.sigmoid(g)


if __name__ == "__main__":
    key = jax.random.PRNGKey(0)
    k_x, k_wh, k_bh, k_wg, k_bg = jax.random.split(key, 5)

    # batch=2, in_channels=4, out_channels=8, spatial=16, kernel=3x3.
    N, C, H, W = 2, 4, 16, 16
    OC, KH, KW = 8, 3, 3
    stride, padding, dilation = 1, 1, 1

    x = jax.random.normal(k_x, (N, C, H, W), jnp.float32)
    fan_in = C * KH * KW
    scale = 1.0 / (fan_in ** 0.5)
    w_h = jax.random.uniform(k_wh, (OC, C, KH, KW), jnp.float32, -scale, scale)
    b_h = jax.random.uniform(k_bh, (OC,), jnp.float32, -scale, scale)
    w_g = jax.random.uniform(k_wg, (OC, C, KH, KW), jnp.float32, -scale, scale)
    b_g = jax.random.uniform(k_bg, (OC,), jnp.float32, -scale, scale)

    ref = _reference(x, w_h, b_h, w_g, b_g, stride=stride, padding=padding,
                     dilation=dilation, activation=None)

    # 1) Default path: bf16 operands (f32 accumulation), fused in-kernel im2col.
    out_bf16 = jax.block_until_ready(
        gated_conv2d(x, w_h, b_h, w_g, b_g, stride=stride, padding=padding,
                     dilation=dilation))
    assert out_bf16.shape == (N, OC, H, W), out_bf16.shape
    assert jnp.allclose(out_bf16, ref, atol=5e-2, rtol=5e-2), \
        float(jnp.max(jnp.abs(out_bf16 - ref)))

    # 2) Full-f32 operands: tight tolerance.
    out_f32 = jax.block_until_ready(
        gated_conv2d(x, w_h, b_h, w_g, b_g, stride=stride, padding=padding,
                     dilation=dilation, matmul_dtype=jnp.float32))
    assert jnp.allclose(out_f32, ref, atol=2e-4, rtol=2e-4), \
        float(jnp.max(jnp.abs(out_f32 - ref)))

    # 3) Optional activation on the h branch (module supports it).
    ref_act = _reference(x, w_h, b_h, w_g, b_g, stride=stride, padding=padding,
                         dilation=dilation, activation=jnp.tanh)
    out_act = jax.block_until_ready(
        gated_conv2d(x, w_h, b_h, w_g, b_g, stride=stride, padding=padding,
                     dilation=dilation, activation=jnp.tanh,
                     matmul_dtype=jnp.float32))
    assert jnp.allclose(out_act, ref_act, atol=2e-4, rtol=2e-4), \
        float(jnp.max(jnp.abs(out_act - ref_act)))

    # 4) Strided conv exercises the im2col + fused-matmul fallback path.
    ref_s2 = _reference(x, w_h, b_h, w_g, b_g, stride=2, padding=1,
                        dilation=1, activation=None)
    out_s2 = jax.block_until_ready(
        gated_conv2d(x, w_h, b_h, w_g, b_g, stride=2, padding=1, dilation=1,
                     matmul_dtype=jnp.float32))
    assert out_s2.shape == ref_s2.shape, (out_s2.shape, ref_s2.shape)
    assert jnp.allclose(out_s2, ref_s2, atol=2e-4, rtol=2e-4), \
        float(jnp.max(jnp.abs(out_s2 - ref_s2)))

    print("KERNEL_OK")
</pallas_src>

<mosaic_0001>
module attributes {stable_mosaic.version = 11 : i64} {
  func.func @_gated_conv_direct_kernel(%arg0: i32, %arg1: i32, %arg2: memref<2x18x18x8xbf16, #tpu.memory_space<any>>, %arg3: memref<9x8x256xbf16, #tpu.memory_space<vmem>>, %arg4: memref<1x256xf32, #tpu.memory_space<vmem>>, %arg5: memref<1x4x16x128xf32, #tpu.memory_space<vmem>>, %arg6: memref<2x6x18x8xbf16, #tpu.memory_space<vmem>>, %arg7: memref<2x!tpu.dma_semaphore, #tpu.memory_space<semaphore_mem>>) attributes {dimension_semantics = [#tpu.dimension_semantics<arbitrary>, #tpu.dimension_semantics<arbitrary>], iteration_bounds = array<i64: 2, 4>, scalar_prefetch = 0 : i64, scratch_operands = 2 : i64, tpu.core_type = #tpu.core_type<tc>, window_params = [{}, {pipeline_mode = #tpu.pipeline_mode<synchronous>, transform_indices = @transform_1, window_bounds = array<i64: 9, 8, 256>}, {pipeline_mode = #tpu.pipeline_mode<synchronous>, transform_indices = @transform_2, window_bounds = array<i64: 1, 256>}, {transform_indices = @transform_3, window_bounds = array<i64: 1, 4, 16, 128>}]} {
    %c4_i32 = arith.constant 4 : i32
    %0 = arith.muli %arg0, %c4_i32 : i32
    %1 = arith.addi %0, %arg1 : i32
    %c2_i32 = arith.constant 2 : i32
    %2 = arith.remsi %1, %c2_i32 : i32
    %c0_i32 = arith.constant 0 : i32
    %3 = arith.cmpi eq, %1, %c0_i32 : i32
    %4 = arith.extui %3 : i1 to i32
    %c0_i32_0 = arith.constant 0 : i32
    %5 = arith.cmpi ne, %4, %c0_i32_0 : i32
    scf.if %5 {
      %c4_i32_46 = arith.constant 4 : i32
      %87 = arith.muli %arg1, %c4_i32_46 : i32
      %c0_i32_47 = arith.constant 0 : i32
      %c0_i32_48 = arith.constant 0 : i32
      %88 = tpu.memref_slice %arg2[%arg0, %87, %c0_i32_47, %c0_i32_48] : memref<2x18x18x8xbf16, #tpu.memory_space<any>> -> memref<1x6x18x8xbf16, #tpu.memory_space<any>>
      %89 = tpu.memref_squeeze %88 : memref<1x6x18x8xbf16, #tpu.memory_space<any>> -> memref<6x18x8xbf16, #tpu.memory_space<any>>
      %c0_i32_49 = arith.constant 0 : i32
      %c0_i32_50 = arith.constant 0 : i32
      %c0_i32_51 = arith.constant 0 : i32
      %90 = tpu.memref_slice %arg6[%2, %c0_i32_49, %c0_i32_50, %c0_i32_51] : memref<2x6x18x8xbf16, #tpu.memory_space<vmem>> -> memref<1x6x18x8xbf16, #tpu.memory_space<vmem>>
      %91 = tpu.memref_squeeze %90 : memref<1x6x18x8xbf16, #tpu.memory_space<vmem>> -> memref<6x18x8xbf16, #tpu.memory_space<vmem>>
      %92 = tpu.memref_slice %arg7[%2] : memref<2x!tpu.dma_semaphore, #tpu.memory_space<semaphore_mem>> -> memref<1x!tpu.dma_semaphore, #tpu.memory_space<semaphore_mem>>
      %93 = tpu.memref_squeeze %92 : memref<1x!tpu.dma_semaphore, #tpu.memory_space<semaphore_mem>> -> memref<!tpu.dma_semaphore, #tpu.memory_space<semaphore_mem>>
      tpu.enqueue_dma source(%89 : memref<6x18x8xbf16, #tpu.memory_space<any>>) target(%91 : memref<6x18x8xbf16, #tpu.memory_space<vmem>>) target_semaphore(%93 : memref<!tpu.dma_semaphore, #tpu.memory_space<semaphore_mem>>)
    } else {
    }
    %c0_i32_1 = arith.constant 0 : i32
    %c0_i32_2 = arith.constant 0 : i32
    %c0_i32_3 = arith.constant 0 : i32
    %c0_i32_4 = arith.constant 0 : i32
    %6 = tpu.memref_slice %arg2[%c0_i32_1, %c0_i32_2, %c0_i32_3, %c0_i32_4] : memref<2x18x18x8xbf16, #tpu.memory_space<any>> -> memref<1x6x18x8xbf16, #tpu.memory_space<any>>
    %7 = tpu.memref_squeeze %6 : memref<1x6x18x8xbf16, #tpu.memory_space<any>> -> memref<6x18x8xbf16, #tpu.memory_space<any>>
    %c0_i32_5 = arith.constant 0 : i32
    %c0_i32_6 = arith.constant 0 : i32
    %c0_i32_7 = arith.constant 0 : i32
    %8 = tpu.memref_slice %arg6[%2, %c0_i32_5, %c0_i32_6, %c0_i32_7] : memref<2x6x18x8xbf16, #tpu.memory_space<vmem>> -> memref<1x6x18x8xbf16, #tpu.memory_space<vmem>>
    %9 = tpu.memref_squeeze %8 : memref<1x6x18x8xbf16, #tpu.memory_space<vmem>> -> memref<6x18x8xbf16, #tpu.memory_space<vmem>>
    %10 = tpu.memref_slice %arg7[%2] : memref<2x!tpu.dma_semaphore, #tpu.memory_space<semaphore_mem>> -> memref<1x!tpu.dma_semaphore, #tpu.memory_space<semaphore_mem>>
    %11 = tpu.memref_squeeze %10 : memref<1x!tpu.dma_semaphore, #tpu.memory_space<semaphore_mem>> -> memref<!tpu.dma_semaphore, #tpu.memory_space<semaphore_mem>>
    tpu.wait_dma2 semaphore(%11 : memref<!tpu.dma_semaphore, #tpu.memory_space<semaphore_mem>>) src(%7 : memref<6x18x8xbf16, #tpu.memory_space<any>>) dst(%9 : memref<6x18x8xbf16, #tpu.memory_space<vmem>>)
    %c1_i32 = arith.constant 1 : i32
    %12 = arith.addi %1, %c1_i32 : i32
    %c8_i32 = arith.constant 8 : i32
    %13 = arith.cmpi slt, %12, %c8_i32 : i32
    %14 = arith.extui %13 : i1 to i32
    %c0_i32_8 = arith.constant 0 : i32
    %15 = arith.cmpi ne, %14, %c0_i32_8 : i32
    scf.if %15 {
      %c1_i32_46 = arith.constant 1 : i32
      %87 = arith.addi %arg1, %c1_i32_46 : i32
      %c4_i32_47 = arith.constant 4 : i32
      %88 = arith.cmpi slt, %87, %c4_i32_47 : i32
      %c1_i32_48 = arith.constant 1 : i32
      %89 = arith.addi %arg1, %c1_i32_48 : i32
      %c0_i32_49 = arith.constant 0 : i32
      %90 = arith.select %88, %89, %c0_i32_49 : i32
      %c1_i32_50 = arith.constant 1 : i32
      %91 = arith.addi %arg1, %c1_i32_50 : i32
      %c4_i32_51 = arith.constant 4 : i32
      %92 = arith.cmpi slt, %91, %c4_i32_51 : i32
      %c1_i32_52 = arith.constant 1 : i32
      %93 = arith.addi %arg0, %c1_i32_52 : i32
      %94 = arith.select %92, %arg0, %93 : i32
      %c1_i32_53 = arith.constant 1 : i32
      %95 = arith.subi %c1_i32_53, %2 : i32
      %c4_i32_54 = arith.constant 4 : i32
      %96 = arith.muli %90, %c4_i32_54 : i32
      %c0_i32_55 = arith.constant 0 : i32
      %c0_i32_56 = arith.constant 0 : i32
      %97 = tpu.memref_slice %arg2[%94, %96, %c0_i32_55, %c0_i32_56] : memref<2x18x18x8xbf16, #tpu.memory_space<any>> -> memref<1x6x18x8xbf16, #tpu.memory_space<any>>
      %98 = tpu.memref_squeeze %97 : memref<1x6x18x8xbf16, #tpu.memory_space<any>> -> memref<6x18x8xbf16, #tpu.memory_space<any>>
      %c0_i32_57 = arith.constant 0 : i32
      %c0_i32_58 = arith.constant 0 : i32
      %c0_i32_59 = arith.constant 0 : i32
      %99 = tpu.memref_slice %arg6[%95, %c0_i32_57, %c0_i32_58, %c0_i32_59] : memref<2x6x18x8xbf16, #tpu.memory_space<vmem>> -> memref<1x6x18x8xbf16, #tpu.memory_space<vmem>>
      %100 = tpu.memref_squeeze %99 : memref<1x6x18x8xbf16, #tpu.memory_space<vmem>> -> memref<6x18x8xbf16, #tpu.memory_space<vmem>>
      %101 = tpu.memref_slice %arg7[%95] : memref<2x!tpu.dma_semaphore, #tpu.memory_space<semaphore_mem>> -> memref<1x!tpu.dma_semaphore, #tpu.memory_space<semaphore_mem>>
      %102 = tpu.memref_squeeze %101 : memref<1x!tpu.dma_semaphore, #tpu.memory_space<semaphore_mem>> -> memref<!tpu.dma_semaphore, #tpu.memory_space<semaphore_mem>>
      tpu.enqueue_dma source(%98 : memref<6x18x8xbf16, #tpu.memory_space<any>>) target(%100 : memref<6x18x8xbf16, #tpu.memory_space<vmem>>) target_semaphore(%102 : memref<!tpu.dma_semaphore, #tpu.memory_space<semaphore_mem>>)
    } else {
    }
    %16 = arith.index_cast %2 : i32 to index
    %c0 = arith.constant 0 : index
    %c0_9 = arith.constant 0 : index
    %c0_10 = arith.constant 0 : index
    %17 = vector.load %arg6[%16, %c0, %c0_9, %c0_10] : memref<2x6x18x8xbf16, #tpu.memory_space<vmem>>, vector<1x6x18x8xbf16>
    %18 = vector.shape_cast %17 : vector<1x6x18x8xbf16> to vector<6x18x8xbf16>
    %cst = arith.constant 0.000000e+00 : f32
    %19 = vector.broadcast %cst : f32 to vector<64x256xf32>
    %20 = vector.extract_strided_slice %18 {offsets = [0, 0, 0], sizes = [4, 16, 8], strides = [1, 1, 1]} : vector<6x18x8xbf16> to vector<4x16x8xbf16>
    %21 = vector.shape_cast %20 : vector<4x16x8xbf16> to vector<64x8xbf16>
    %c0_11 = arith.constant 0 : index
    %c0_12 = arith.constant 0 : index
    %c0_13 = arith.constant 0 : index
    %22 = vector.load %arg3[%c0_11, %c0_12, %c0_13] : memref<9x8x256xbf16, #tpu.memory_space<vmem>>, vector<1x8x256xbf16>
    %23 = vector.shape_cast %22 : vector<1x8x256xbf16> to vector<8x256xbf16>
    %cst_14 = arith.constant dense<0.000000e+00> : vector<64x256xf32>
    %24 = tpu.matmul %21, %23, %cst_14 {dimension_numbers = #tpu.dot_dimension_numbers<[1], [0], [0], [1], [0, 0, 1, 1], [], []>} : vector<64x8xbf16>, vector<8x256xbf16>, vector<64x256xf32> -> vector<64x256xf32>
    %25 = arith.addf %19, %24 : vector<64x256xf32>
    %26 = vector.extract_strided_slice %18 {offsets = [0, 1, 0], sizes = [4, 16, 8], strides = [1, 1, 1]} : vector<6x18x8xbf16> to vector<4x16x8xbf16>
    %27 = vector.shape_cast %26 : vector<4x16x8xbf16> to vector<64x8xbf16>
    %c1 = arith.constant 1 : index
    %c0_15 = arith.constant 0 : index
    %c0_16 = arith.constant 0 : index
    %28 = vector.load %arg3[%c1, %c0_15, %c0_16] : memref<9x8x256xbf16, #tpu.memory_space<vmem>>, vector<1x8x256xbf16>
    %29 = vector.shape_cast %28 : vector<1x8x256xbf16> to vector<8x256xbf16>
    %cst_17 = arith.constant dense<0.000000e+00> : vector<64x256xf32>
    %30 = tpu.matmul %27, %29, %cst_17 {dimension_numbers = #tpu.dot_dimension_numbers<[1], [0], [0], [1], [0, 0, 1, 1], [], []>} : vector<64x8xbf16>, vector<8x256xbf16>, vector<64x256xf32> -> vector<64x256xf32>
    %31 = arith.addf %25, %30 : vector<64x256xf32>
    %32 = vector.extract_strided_slice %18 {offsets = [0, 2, 0], sizes = [4, 16, 8], strides = [1, 1, 1]} : vector<6x18x8xbf16> to vector<4x16x8xbf16>
    %33 = vector.shape_cast %32 : vector<4x16x8xbf16> to vector<64x8xbf16>
    %c2 = arith.constant 2 : index
    %c0_18 = arith.constant 0 : index
    %c0_19 = arith.constant 0 : index
    %34 = vector.load %arg3[%c2, %c0_18, %c0_19] : memref<9x8x256xbf16, #tpu.memory_space<vmem>>, vector<1x8x256xbf16>
    %35 = vector.shape_cast %34 : vector<1x8x256xbf16> to vector<8x256xbf16>
    %cst_20 = arith.constant dense<0.000000e+00> : vector<64x256xf32>
    %36 = tpu.matmul %33, %35, %cst_20 {dimension_numbers = #tpu.dot_dimension_numbers<[1], [0], [0], [1], [0, 0, 1, 1], [], []>} : vector<64x8xbf16>, vector<8x256xbf16>, vector<64x256xf32> -> vector<64x256xf32>
    %37 = arith.addf %31, %36 : vector<64x256xf32>
    %38 = vector.extract_strided_slice %18 {offsets = [1, 0, 0], sizes = [4, 16, 8], strides = [1, 1, 1]} : vector<6x18x8xbf16> to vector<4x16x8xbf16>
    %39 = vector.shape_cast %38 : vector<4x16x8xbf16> to vector<64x8xbf16>
    %c3 = arith.constant 3 : index
    %c0_21 = arith.constant 0 : index
    %c0_22 = arith.constant 0 : index
    %40 = vector.load %arg3[%c3, %c0_21, %c0_22] : memref<9x8x256xbf16, #tpu.memory_space<vmem>>, vector<1x8x256xbf16>
    %41 = vector.shape_cast %40 : vector<1x8x256xbf16> to vector<8x256xbf16>
    %cst_23 = arith.constant dense<0.000000e+00> : vector<64x256xf32>
    %42 = tpu.matmul %39, %41, %cst_23 {dimension_numbers = #tpu.dot_dimension_numbers<[1], [0], [0], [1], [0, 0, 1, 1], [], []>} : vector<64x8xbf16>, vector<8x256xbf16>, vector<64x256xf32> -> vector<64x256xf32>
    %43 = arith.addf %37, %42 : vector<64x256xf32>
    %44 = vector.extract_strided_slice %18 {offsets = [1, 1, 0], sizes = [4, 16, 8], strides = [1, 1, 1]} : vector<6x18x8xbf16> to vector<4x16x8xbf16>
    %45 = vector.shape_cast %44 : vector<4x16x8xbf16> to vector<64x8xbf16>
    %c4 = arith.constant 4 : index
    %c0_24 = arith.constant 0 : index
    %c0_25 = arith.constant 0 : index
    %46 = vector.load %arg3[%c4, %c0_24, %c0_25] : memref<9x8x256xbf16, #tpu.memory_space<vmem>>, vector<1x8x256xbf16>
    %47 = vector.shape_cast %46 : vector<1x8x256xbf16> to vector<8x256xbf16>
    %cst_26 = arith.constant dense<0.000000e+00> : vector<64x256xf32>
    %48 = tpu.matmul %45, %47, %cst_26 {dimension_numbers = #tpu.dot_dimension_numbers<[1], [0], [0], [1], [0, 0, 1, 1], [], []>} : vector<64x8xbf16>, vector<8x256xbf16>, vector<64x256xf32> -> vector<64x256xf32>
    %49 = arith.addf %43, %48 : vector<64x256xf32>
    %50 = vector.extract_strided_slice %18 {offsets = [1, 2, 0], sizes = [4, 16, 8], strides = [1, 1, 1]} : vector<6x18x8xbf16> to vector<4x16x8xbf16>
    %51 = vector.shape_cast %50 : vector<4x16x8xbf16> to vector<64x8xbf16>
    %c5 = arith.constant 5 : index
    %c0_27 = arith.constant 0 : index
    %c0_28 = arith.constant 0 : index
    %52 = vector.load %arg3[%c5, %c0_27, %c0_28] : memref<9x8x256xbf16, #tpu.memory_space<vmem>>, vector<1x8x256xbf16>
    %53 = vector.shape_cast %52 : vector<1x8x256xbf16> to vector<8x256xbf16>
    %cst_29 = arith.constant dense<0.000000e+00> : vector<64x256xf32>
    %54 = tpu.matmul %51, %53, %cst_29 {dimension_numbers = #tpu.dot_dimension_numbers<[1], [0], [0], [1], [0, 0, 1, 1], [], []>} : vector<64x8xbf16>, vector<8x256xbf16>, vector<64x256xf32> -> vector<64x256xf32>
    %55 = arith.addf %49, %54 : vector<64x256xf32>
    %56 = vector.extract_strided_slice %18 {offsets = [2, 0, 0], sizes = [4, 16, 8], strides = [1, 1, 1]} : vector<6x18x8xbf16> to vector<4x16x8xbf16>
    %57 = vector.shape_cast %56 : vector<4x16x8xbf16> to vector<64x8xbf16>
    %c6 = arith.constant 6 : index
    %c0_30 = arith.constant 0 : index
    %c0_31 = arith.constant 0 : index
    %58 = vector.load %arg3[%c6, %c0_30, %c0_31] : memref<9x8x256xbf16, #tpu.memory_space<vmem>>, vector<1x8x256xbf16>
    %59 = vector.shape_cast %58 : vector<1x8x256xbf16> to vector<8x256xbf16>
    %cst_32 = arith.constant dense<0.000000e+00> : vector<64x256xf32>
    %60 = tpu.matmul %57, %59, %cst_32 {dimension_numbers = #tpu.dot_dimension_numbers<[1], [0], [0], [1], [0, 0, 1, 1], [], []>} : vector<64x8xbf16>, vector<8x256xbf16>, vector<64x256xf32> -> vector<64x256xf32>
    %61 = arith.addf %55, %60 : vector<64x256xf32>
    %62 = vector.extract_strided_slice %18 {offsets = [2, 1, 0], sizes = [4, 16, 8], strides = [1, 1, 1]} : vector<6x18x8xbf16> to vector<4x16x8xbf16>
    %63 = vector.shape_cast %62 : vector<4x16x8xbf16> to vector<64x8xbf16>
    %c7 = arith.constant 7 : index
    %c0_33 = arith.constant 0 : index
    %c0_34 = arith.constant 0 : index
    %64 = vector.load %arg3[%c7, %c0_33, %c0_34] : memref<9x8x256xbf16, #tpu.memory_space<vmem>>, vector<1x8x256xbf16>
    %65 = vector.shape_cast %64 : vector<1x8x256xbf16> to vector<8x256xbf16>
    %cst_35 = arith.constant dense<0.000000e+00> : vector<64x256xf32>
    %66 = tpu.matmul %63, %65, %cst_35 {dimension_numbers = #tpu.dot_dimension_numbers<[1], [0], [0], [1], [0, 0, 1, 1], [], []>} : vector<64x8xbf16>, vector<8x256xbf16>, vector<64x256xf32> -> vector<64x256xf32>
    %67 = arith.addf %61, %66 : vector<64x256xf32>
    %68 = vector.extract_strided_slice %18 {offsets = [2, 2, 0], sizes = [4, 16, 8], strides = [1, 1, 1]} : vector<6x18x8xbf16> to vector<4x16x8xbf16>
    %69 = vector.shape_cast %68 : vector<4x16x8xbf16> to vector<64x8xbf16>
    %c8 = arith.constant 8 : index
    %c0_36 = arith.constant 0 : index
    %c0_37 = arith.constant 0 : index
    %70 = vector.load %arg3[%c8, %c0_36, %c0_37] : memref<9x8x256xbf16, #tpu.memory_space<vmem>>, vector<1x8x256xbf16>
    %71 = vector.shape_cast %70 : vector<1x8x256xbf16> to vector<8x256xbf16>
    %cst_38 = arith.constant dense<0.000000e+00> : vector<64x256xf32>
    %72 = tpu.matmul %69, %71, %cst_38 {dimension_numbers = #tpu.dot_dimension_numbers<[1], [0], [0], [1], [0, 0, 1, 1], [], []>} : vector<64x8xbf16>, vector<8x256xbf16>, vector<64x256xf32> -> vector<64x256xf32>
    %73 = arith.addf %67, %72 : vector<64x256xf32>
    %c0_39 = arith.constant 0 : index
    %c0_40 = arith.constant 0 : index
    %74 = vector.load %arg4[%c0_39, %c0_40] : memref<1x256xf32, #tpu.memory_space<vmem>>, vector<1x256xf32>
    %75 = vector.broadcast %74 : vector<1x256xf32> to vector<64x256xf32>
    %76 = arith.addf %73, %75 : vector<64x256xf32>
    %77 = vector.extract_strided_slice %76 {offsets = [0, 0], sizes = [64, 128], strides = [1, 1]} : vector<64x256xf32> to vector<64x128xf32>
    %78 = vector.extract_strided_slice %76 {offsets = [0, 128], sizes = [64, 128], strides = [1, 1]} : vector<64x256xf32> to vector<64x128xf32>
    %79 = arith.negf %78 : vector<64x128xf32>
    %80 = math.exp %79 : vector<64x128xf32>
    %cst_41 = arith.constant 1.000000e+00 : f32
    %81 = vector.broadcast %cst_41 : f32 to vector<64x128xf32>
    %82 = arith.addf %81, %80 : vector<64x128xf32>
    %83 = arith.divf %81, %82 : vector<64x128xf32>
    %84 = arith.mulf %77, %83 : vector<64x128xf32>
    %85 = vector.shape_cast %84 : vector<64x128xf32> to vector<1x4x16x128xf32>
    %c0_42 = arith.constant 0 : index
    %c0_43 = arith.constant 0 : index
    %c0_44 = arith.constant 0 : index
    %c0_45 = arith.constant 0 : index
    %86 = vector.load %arg5[%c0_42, %c0_43, %c0_44, %c0_45] : memref<1x4x16x128xf32, #tpu.memory_space<vmem>>, vector<1x4x16x128xf32>
    tpu.vector_store %arg5[%c0_42, %c0_43, %c0_44, %c0_45], %85 {strides = array<i32>} : memref<1x4x16x128xf32, #tpu.memory_space<vmem>>, vector<1x4x16x128xf32>,
    return
  }
  func.func @transform_1(%arg0: i32, %arg1: i32) -> (i32, i32, i32) {
    %c0_i32 = arith.constant 0 : i32
    %c0_i32_0 = arith.constant 0 : i32
    %c0_i32_1 = arith.constant 0 : i32
    %c0_i32_2 = arith.constant 0 : i32
    return %c0_i32, %c0_i32_0, %c0_i32_1 : i32, i32, i32
  }
  func.func @transform_2(%arg0: i32, %arg1: i32) -> (i32, i32) {
    %c0_i32 = arith.constant 0 : i32
    %c0_i32_0 = arith.constant 0 : i32
    %c0_i32_1 = arith.constant 0 : i32
    return %c0_i32, %c0_i32_0 : i32, i32
  }
  func.func @transform_3(%arg0: i32, %arg1: i32) -> (i32, i32, i32, i32) {
    %c0_i32 = arith.constant 0 : i32
    %c0_i32_0 = arith.constant 0 : i32
    %c0_i32_1 = arith.constant 0 : i32
    return %arg0, %arg1, %c0_i32, %c0_i32_0 : i32, i32, i32, i32
  }
}

module attributes {stable_mosaic.version = 11 : i64} {
  func.func @_gated_conv_direct_kernel(%arg0: i32, %arg1: i32, %arg2: memref<2x18x18x8xbf16, #tpu.memory_space<any>>, %arg3: memref<9x8x256xbf16, #tpu.memory_space<vmem>>, %arg4: memref<1x256xf32, #tpu.memory_space<vmem>>, %arg5: memref<1x4x16x128xf32, #tpu.memory_space<vmem>>, %arg6: memref<2x6x18x8xbf16, #tpu.memory_space<vmem>>, %arg7: memref<2x!tpu.dma_semaphore, #tpu.memory_space<semaphore_mem>>) attributes {dimension_semantics = [#tpu.dimension_semantics<arbitrary>, #tpu.dimension_semantics<arbitrary>], iteration_bounds = array<i64: 2, 4>, scalar_prefetch = 0 : i64, scratch_operands = 2 : i64, tpu.core_type = #tpu.core_type<tc>, window_params = [{}, {pipeline_mode = #tpu.pipeline_mode<synchronous>, transform_indices = @transform_1, window_bounds = array<i64: 9, 8, 256>}, {pipeline_mode = #tpu.pipeline_mode<synchronous>, transform_indices = @transform_2, window_bounds = array<i64: 1, 256>}, {transform_indices = @transform_3, window_bounds = array<i64: 1, 4, 16, 128>}]} {
    %c4_i32 = arith.constant 4 : i32
    %0 = arith.muli %arg0, %c4_i32 : i32
    %1 = arith.addi %0, %arg1 : i32
    %c2_i32 = arith.constant 2 : i32
    %2 = arith.remsi %1, %c2_i32 : i32
    %c0_i32 = arith.constant 0 : i32
    %3 = arith.cmpi eq, %1, %c0_i32 : i32
    %4 = arith.extui %3 : i1 to i32
    %c0_i32_0 = arith.constant 0 : i32
    %5 = arith.cmpi ne, %4, %c0_i32_0 : i32
    scf.if %5 {
      %c4_i32_46 = arith.constant 4 : i32
      %87 = arith.muli %arg1, %c4_i32_46 : i32
      %c0_i32_47 = arith.constant 0 : i32
      %c0_i32_48 = arith.constant 0 : i32
      %88 = tpu.memref_slice %arg2[%arg0, %87, %c0_i32_47, %c0_i32_48] : memref<2x18x18x8xbf16, #tpu.memory_space<any>> -> memref<1x6x18x8xbf16, #tpu.memory_space<any>>
      %89 = tpu.memref_squeeze %88 : memref<1x6x18x8xbf16, #tpu.memory_space<any>> -> memref<6x18x8xbf16, #tpu.memory_space<any>>
      %c0_i32_49 = arith.constant 0 : i32
      %c0_i32_50 = arith.constant 0 : i32
      %c0_i32_51 = arith.constant 0 : i32
      %90 = tpu.memref_slice %arg6[%2, %c0_i32_49, %c0_i32_50, %c0_i32_51] : memref<2x6x18x8xbf16, #tpu.memory_space<vmem>> -> memref<1x6x18x8xbf16, #tpu.memory_space<vmem>>
      %91 = tpu.memref_squeeze %90 : memref<1x6x18x8xbf16, #tpu.memory_space<vmem>> -> memref<6x18x8xbf16, #tpu.memory_space<vmem>>
      %92 = tpu.memref_slice %arg7[%2] : memref<2x!tpu.dma_semaphore, #tpu.memory_space<semaphore_mem>> -> memref<1x!tpu.dma_semaphore, #tpu.memory_space<semaphore_mem>>
      %93 = tpu.memref_squeeze %92 : memref<1x!tpu.dma_semaphore, #tpu.memory_space<semaphore_mem>> -> memref<!tpu.dma_semaphore, #tpu.memory_space<semaphore_mem>>
      tpu.enqueue_dma source(%89 : memref<6x18x8xbf16, #tpu.memory_space<any>>) target(%91 : memref<6x18x8xbf16, #tpu.memory_space<vmem>>) target_semaphore(%93 : memref<!tpu.dma_semaphore, #tpu.memory_space<semaphore_mem>>)
    } else {
    }
    %c0_i32_1 = arith.constant 0 : i32
    %c0_i32_2 = arith.constant 0 : i32
    %c0_i32_3 = arith.constant 0 : i32
    %c0_i32_4 = arith.constant 0 : i32
    %6 = tpu.memref_slice %arg2[%c0_i32_1, %c0_i32_2, %c0_i32_3, %c0_i32_4] : memref<2x18x18x8xbf16, #tpu.memory_space<any>> -> memref<1x6x18x8xbf16, #tpu.memory_space<any>>
    %7 = tpu.memref_squeeze %6 : memref<1x6x18x8xbf16, #tpu.memory_space<any>> -> memref<6x18x8xbf16, #tpu.memory_space<any>>
    %c0_i32_5 = arith.constant 0 : i32
    %c0_i32_6 = arith.constant 0 : i32
    %c0_i32_7 = arith.constant 0 : i32
    %8 = tpu.memref_slice %arg6[%2, %c0_i32_5, %c0_i32_6, %c0_i32_7] : memref<2x6x18x8xbf16, #tpu.memory_space<vmem>> -> memref<1x6x18x8xbf16, #tpu.memory_space<vmem>>
    %9 = tpu.memref_squeeze %8 : memref<1x6x18x8xbf16, #tpu.memory_space<vmem>> -> memref<6x18x8xbf16, #tpu.memory_space<vmem>>
    %10 = tpu.memref_slice %arg7[%2] : memref<2x!tpu.dma_semaphore, #tpu.memory_space<semaphore_mem>> -> memref<1x!tpu.dma_semaphore, #tpu.memory_space<semaphore_mem>>
    %11 = tpu.memref_squeeze %10 : memref<1x!tpu.dma_semaphore, #tpu.memory_space<semaphore_mem>> -> memref<!tpu.dma_semaphore, #tpu.memory_space<semaphore_mem>>
    tpu.wait_dma2 semaphore(%11 : memref<!tpu.dma_semaphore, #tpu.memory_space<semaphore_mem>>) src(%7 : memref<6x18x8xbf16, #tpu.memory_space<any>>) dst(%9 : memref<6x18x8xbf16, #tpu.memory_space<vmem>>)
    %c1_i32 = arith.constant 1 : i32
    %12 = arith.addi %1, %c1_i32 : i32
    %c8_i32 = arith.constant 8 : i32
    %13 = arith.cmpi slt, %12, %c8_i32 : i32
    %14 = arith.extui %13 : i1 to i32
    %c0_i32_8 = arith.constant 0 : i32
    %15 = arith.cmpi ne, %14, %c0_i32_8 : i32
    scf.if %15 {
      %c1_i32_46 = arith.constant 1 : i32
      %87 = arith.addi %arg1, %c1_i32_46 : i32
      %c4_i32_47 = arith.constant 4 : i32
      %88 = arith.cmpi slt, %87, %c4_i32_47 : i32
      %c1_i32_48 = arith.constant 1 : i32
      %89 = arith.addi %arg1, %c1_i32_48 : i32
      %c0_i32_49 = arith.constant 0 : i32
      %90 = arith.select %88, %89, %c0_i32_49 : i32
      %c1_i32_50 = arith.constant 1 : i32
      %91 = arith.addi %arg1, %c1_i32_50 : i32
      %c4_i32_51 = arith.constant 4 : i32
      %92 = arith.cmpi slt, %91, %c4_i32_51 : i32
      %c1_i32_52 = arith.constant 1 : i32
      %93 = arith.addi %arg0, %c1_i32_52 : i32
      %94 = arith.select %92, %arg0, %93 : i32
      %c1_i32_53 = arith.constant 1 : i32
      %95 = arith.subi %c1_i32_53, %2 : i32
      %c4_i32_54 = arith.constant 4 : i32
      %96 = arith.muli %90, %c4_i32_54 : i32
      %c0_i32_55 = arith.constant 0 : i32
      %c0_i32_56 = arith.constant 0 : i32
      %97 = tpu.memref_slice %arg2[%94, %96, %c0_i32_55, %c0_i32_56] : memref<2x18x18x8xbf16, #tpu.memory_space<any>> -> memref<1x6x18x8xbf16, #tpu.memory_space<any>>
      %98 = tpu.memref_squeeze %97 : memref<1x6x18x8xbf16, #tpu.memory_space<any>> -> memref<6x18x8xbf16, #tpu.memory_space<any>>
      %c0_i32_57 = arith.constant 0 : i32
      %c0_i32_58 = arith.constant 0 : i32
      %c0_i32_59 = arith.constant 0 : i32
      %99 = tpu.memref_slice %arg6[%95, %c0_i32_57, %c0_i32_58, %c0_i32_59] : memref<2x6x18x8xbf16, #tpu.memory_space<vmem>> -> memref<1x6x18x8xbf16, #tpu.memory_space<vmem>>
      %100 = tpu.memref_squeeze %99 : memref<1x6x18x8xbf16, #tpu.memory_space<vmem>> -> memref<6x18x8xbf16, #tpu.memory_space<vmem>>
      %101 = tpu.memref_slice %arg7[%95] : memref<2x!tpu.dma_semaphore, #tpu.memory_space<semaphore_mem>> -> memref<1x!tpu.dma_semaphore, #tpu.memory_space<semaphore_mem>>
      %102 = tpu.memref_squeeze %101 : memref<1x!tpu.dma_semaphore, #tpu.memory_space<semaphore_mem>> -> memref<!tpu.dma_semaphore, #tpu.memory_space<semaphore_mem>>
      tpu.enqueue_dma source(%98 : memref<6x18x8xbf16, #tpu.memory_space<any>>) target(%100 : memref<6x18x8xbf16, #tpu.memory_space<vmem>>) target_semaphore(%102 : memref<!tpu.dma_semaphore, #tpu.memory_space<semaphore_mem>>)
    } else {
    }
    %16 = arith.index_cast %2 : i32 to index
    %c0 = arith.constant 0 : index
    %c0_9 = arith.constant 0 : index
    %c0_10 = arith.constant 0 : index
    %17 = vector.load %arg6[%16, %c0, %c0_9, %c0_10] : memref<2x6x18x8xbf16, #tpu.memory_space<vmem>>, vector<1x6x18x8xbf16>
    %18 = vector.shape_cast %17 : vector<1x6x18x8xbf16> to vector<6x18x8xbf16>
    %cst = arith.constant 0.000000e+00 : f32
    %19 = vector.broadcast %cst : f32 to vector<64x256xf32>
    %20 = vector.extract_strided_slice %18 {offsets = [0, 0, 0], sizes = [4, 16, 8], strides = [1, 1, 1]} : vector<6x18x8xbf16> to vector<4x16x8xbf16>
    %21 = vector.shape_cast %20 : vector<4x16x8xbf16> to vector<64x8xbf16>
    %c0_11 = arith.constant 0 : index
    %c0_12 = arith.constant 0 : index
    %c0_13 = arith.constant 0 : index
    %22 = vector.load %arg3[%c0_11, %c0_12, %c0_13] : memref<9x8x256xbf16, #tpu.memory_space<vmem>>, vector<1x8x256xbf16>
    %23 = vector.shape_cast %22 : vector<1x8x256xbf16> to vector<8x256xbf16>
    %cst_14 = arith.constant dense<0.000000e+00> : vector<64x256xf32>
    %24 = tpu.matmul %21, %23, %cst_14 {dimension_numbers = #tpu.dot_dimension_numbers<[1], [0], [0], [1], [0, 0, 1, 1], [], []>} : vector<64x8xbf16>, vector<8x256xbf16>, vector<64x256xf32> -> vector<64x256xf32>
    %25 = arith.addf %19, %24 : vector<64x256xf32>
    %26 = vector.extract_strided_slice %18 {offsets = [0, 1, 0], sizes = [4, 16, 8], strides = [1, 1, 1]} : vector<6x18x8xbf16> to vector<4x16x8xbf16>
    %27 = vector.shape_cast %26 : vector<4x16x8xbf16> to vector<64x8xbf16>
    %c1 = arith.constant 1 : index
    %c0_15 = arith.constant 0 : index
    %c0_16 = arith.constant 0 : index
    %28 = vector.load %arg3[%c1, %c0_15, %c0_16] : memref<9x8x256xbf16, #tpu.memory_space<vmem>>, vector<1x8x256xbf16>
    %29 = vector.shape_cast %28 : vector<1x8x256xbf16> to vector<8x256xbf16>
    %cst_17 = arith.constant dense<0.000000e+00> : vector<64x256xf32>
    %30 = tpu.matmul %27, %29, %cst_17 {dimension_numbers = #tpu.dot_dimension_numbers<[1], [0], [0], [1], [0, 0, 1, 1], [], []>} : vector<64x8xbf16>, vector<8x256xbf16>, vector<64x256xf32> -> vector<64x256xf32>
    %31 = arith.addf %25, %30 : vector<64x256xf32>
    %32 = vector.extract_strided_slice %18 {offsets = [0, 2, 0], sizes = [4, 16, 8], strides = [1, 1, 1]} : vector<6x18x8xbf16> to vector<4x16x8xbf16>
    %33 = vector.shape_cast %32 : vector<4x16x8xbf16> to vector<64x8xbf16>
    %c2 = arith.constant 2 : index
    %c0_18 = arith.constant 0 : index
    %c0_19 = arith.constant 0 : index
    %34 = vector.load %arg3[%c2, %c0_18, %c0_19] : memref<9x8x256xbf16, #tpu.memory_space<vmem>>, vector<1x8x256xbf16>
    %35 = vector.shape_cast %34 : vector<1x8x256xbf16> to vector<8x256xbf16>
    %cst_20 = arith.constant dense<0.000000e+00> : vector<64x256xf32>
    %36 = tpu.matmul %33, %35, %cst_20 {dimension_numbers = #tpu.dot_dimension_numbers<[1], [0], [0], [1], [0, 0, 1, 1], [], []>} : vector<64x8xbf16>, vector<8x256xbf16>, vector<64x256xf32> -> vector<64x256xf32>
    %37 = arith.addf %31, %36 : vector<64x256xf32>
    %38 = vector.extract_strided_slice %18 {offsets = [1, 0, 0], sizes = [4, 16, 8], strides = [1, 1, 1]} : vector<6x18x8xbf16> to vector<4x16x8xbf16>
    %39 = vector.shape_cast %38 : vector<4x16x8xbf16> to vector<64x8xbf16>
    %c3 = arith.constant 3 : index
    %c0_21 = arith.constant 0 : index
    %c0_22 = arith.constant 0 : index
    %40 = vector.load %arg3[%c3, %c0_21, %c0_22] : memref<9x8x256xbf16, #tpu.memory_space<vmem>>, vector<1x8x256xbf16>
    %41 = vector.shape_cast %40 : vector<1x8x256xbf16> to vector<8x256xbf16>
    %cst_23 = arith.constant dense<0.000000e+00> : vector<64x256xf32>
    %42 = tpu.matmul %39, %41, %cst_23 {dimension_numbers = #tpu.dot_dimension_numbers<[1], [0], [0], [1], [0, 0, 1, 1], [], []>} : vector<64x8xbf16>, vector<8x256xbf16>, vector<64x256xf32> -> vector<64x256xf32>
    %43 = arith.addf %37, %42 : vector<64x256xf32>
    %44 = vector.extract_strided_slice %18 {offsets = [1, 1, 0], sizes = [4, 16, 8], strides = [1, 1, 1]} : vector<6x18x8xbf16> to vector<4x16x8xbf16>
    %45 = vector.shape_cast %44 : vector<4x16x8xbf16> to vector<64x8xbf16>
    %c4 = arith.constant 4 : index
    %c0_24 = arith.constant 0 : index
    %c0_25 = arith.constant 0 : index
    %46 = vector.load %arg3[%c4, %c0_24, %c0_25] : memref<9x8x256xbf16, #tpu.memory_space<vmem>>, vector<1x8x256xbf16>
    %47 = vector.shape_cast %46 : vector<1x8x256xbf16> to vector<8x256xbf16>
    %cst_26 = arith.constant dense<0.000000e+00> : vector<64x256xf32>
    %48 = tpu.matmul %45, %47, %cst_26 {dimension_numbers = #tpu.dot_dimension_numbers<[1], [0], [0], [1], [0, 0, 1, 1], [], []>} : vector<64x8xbf16>, vector<8x256xbf16>, vector<64x256xf32> -> vector<64x256xf32>
    %49 = arith.addf %43, %48 : vector<64x256xf32>
    %50 = vector.extract_strided_slice %18 {offsets = [1, 2, 0], sizes = [4, 16, 8], strides = [1, 1, 1]} : vector<6x18x8xbf16> to vector<4x16x8xbf16>
    %51 = vector.shape_cast %50 : vector<4x16x8xbf16> to vector<64x8xbf16>
    %c5 = arith.constant 5 : index
    %c0_27 = arith.constant 0 : index
    %c0_28 = arith.constant 0 : index
    %52 = vector.load %arg3[%c5, %c0_27, %c0_28] : memref<9x8x256xbf16, #tpu.memory_space<vmem>>, vector<1x8x256xbf16>
    %53 = vector.shape_cast %52 : vector<1x8x256xbf16> to vector<8x256xbf16>
    %cst_29 = arith.constant dense<0.000000e+00> : vector<64x256xf32>
    %54 = tpu.matmul %51, %53, %cst_29 {dimension_numbers = #tpu.dot_dimension_numbers<[1], [0], [0], [1], [0, 0, 1, 1], [], []>} : vector<64x8xbf16>, vector<8x256xbf16>, vector<64x256xf32> -> vector<64x256xf32>
    %55 = arith.addf %49, %54 : vector<64x256xf32>
    %56 = vector.extract_strided_slice %18 {offsets = [2, 0, 0], sizes = [4, 16, 8], strides = [1, 1, 1]} : vector<6x18x8xbf16> to vector<4x16x8xbf16>
    %57 = vector.shape_cast %56 : vector<4x16x8xbf16> to vector<64x8xbf16>
    %c6 = arith.constant 6 : index
    %c0_30 = arith.constant 0 : index
    %c0_31 = arith.constant 0 : index
    %58 = vector.load %arg3[%c6, %c0_30, %c0_31] : memref<9x8x256xbf16, #tpu.memory_space<vmem>>, vector<1x8x256xbf16>
    %59 = vector.shape_cast %58 : vector<1x8x256xbf16> to vector<8x256xbf16>
    %cst_32 = arith.constant dense<0.000000e+00> : vector<64x256xf32>
    %60 = tpu.matmul %57, %59, %cst_32 {dimension_numbers = #tpu.dot_dimension_numbers<[1], [0], [0], [1], [0, 0, 1, 1], [], []>} : vector<64x8xbf16>, vector<8x256xbf16>, vector<64x256xf32> -> vector<64x256xf32>
    %61 = arith.addf %55, %60 : vector<64x256xf32>
    %62 = vector.extract_strided_slice %18 {offsets = [2, 1, 0], sizes = [4, 16, 8], strides = [1, 1, 1]} : vector<6x18x8xbf16> to vector<4x16x8xbf16>
    %63 = vector.shape_cast %62 : vector<4x16x8xbf16> to vector<64x8xbf16>
    %c7 = arith.constant 7 : index
    %c0_33 = arith.constant 0 : index
    %c0_34 = arith.constant 0 : index
    %64 = vector.load %arg3[%c7, %c0_33, %c0_34] : memref<9x8x256xbf16, #tpu.memory_space<vmem>>, vector<1x8x256xbf16>
    %65 = vector.shape_cast %64 : vector<1x8x256xbf16> to vector<8x256xbf16>
    %cst_35 = arith.constant dense<0.000000e+00> : vector<64x256xf32>
    %66 = tpu.matmul %63, %65, %cst_35 {dimension_numbers = #tpu.dot_dimension_numbers<[1], [0], [0], [1], [0, 0, 1, 1], [], []>} : vector<64x8xbf16>, vector<8x256xbf16>, vector<64x256xf32> -> vector<64x256xf32>
    %67 = arith.addf %61, %66 : vector<64x256xf32>
    %68 = vector.extract_strided_slice %18 {offsets = [2, 2, 0], sizes = [4, 16, 8], strides = [1, 1, 1]} : vector<6x18x8xbf16> to vector<4x16x8xbf16>
    %69 = vector.shape_cast %68 : vector<4x16x8xbf16> to vector<64x8xbf16>
    %c8 = arith.constant 8 : index
    %c0_36 = arith.constant 0 : index
    %c0_37 = arith.constant 0 : index
    %70 = vector.load %arg3[%c8, %c0_36, %c0_37] : memref<9x8x256xbf16, #tpu.memory_space<vmem>>, vector<1x8x256xbf16>
    %71 = vector.shape_cast %70 : vector<1x8x256xbf16> to vector<8x256xbf16>
    %cst_38 = arith.constant dense<0.000000e+00> : vector<64x256xf32>
    %72 = tpu.matmul %69, %71, %cst_38 {dimension_numbers = #tpu.dot_dimension_numbers<[1], [0], [0], [1], [0, 0, 1, 1], [], []>} : vector<64x8xbf16>, vector<8x256xbf16>, vector<64x256xf32> -> vector<64x256xf32>
    %73 = arith.addf %67, %72 : vector<64x256xf32>
    %c0_39 = arith.constant 0 : index
    %c0_40 = arith.constant 0 : index
    %74 = vector.load %arg4[%c0_39, %c0_40] : memref<1x256xf32, #tpu.memory_space<vmem>>, vector<1x256xf32>
    %75 = vector.broadcast %74 : vector<1x256xf32> to vector<64x256xf32>
    %76 = arith.addf %73, %75 : vector<64x256xf32>
    %77 = vector.extract_strided_slice %76 {offsets = [0, 0], sizes = [64, 128], strides = [1, 1]} : vector<64x256xf32> to vector<64x128xf32>
    %78 = vector.extract_strided_slice %76 {offsets = [0, 128], sizes = [64, 128], strides = [1, 1]} : vector<64x256xf32> to vector<64x128xf32>
    %79 = arith.negf %78 : vector<64x128xf32>
    %80 = math.exp %79 : vector<64x128xf32>
    %cst_41 = arith.constant 1.000000e+00 : f32
    %81 = vector.broadcast %cst_41 : f32 to vector<64x128xf32>
    %82 = arith.addf %81, %80 : vector<64x128xf32>
    %83 = arith.divf %81, %82 : vector<64x128xf32>
    %84 = arith.mulf %77, %83 : vector<64x128xf32>
    %85 = vector.shape_cast %84 : vector<64x128xf32> to vector<1x4x16x128xf32>
    %c0_42 = arith.constant 0 : index
    %c0_43 = arith.constant 0 : index
    %c0_44 = arith.constant 0 : index
    %c0_45 = arith.constant 0 : index
    %86 = vector.load %arg5[%c0_42, %c0_43, %c0_44, %c0_45] : memref<1x4x16x128xf32, #tpu.memory_space<vmem>>, vector<1x4x16x128xf32>
    tpu.vector_store %arg5[%c0_42, %c0_43, %c0_44, %c0_45], %85 {strides = array<i32>} : memref<1x4x16x128xf32, #tpu.memory_space<vmem>>, vector<1x4x16x128xf32>,
    return
  }
  func.func @transform_1(%arg0: i32, %arg1: i32) -> (i32, i32, i32) {
    %c0_i32 = arith.constant 0 : i32
    %c0_i32_0 = arith.constant 0 : i32
    %c0_i32_1 = arith.constant 0 : i32
    %c0_i32_2 = arith.constant 0 : i32
    return %c0_i32, %c0_i32_0, %c0_i32_1 : i32, i32, i32
  }
  func.func @transform_2(%arg0: i32, %arg1: i32) -> (i32, i32) {
    %c0_i32 = arith.constant 0 : i32
    %c0_i32_0 = arith.constant 0 : i32
    %c0_i32_1 = arith.constant 0 : i32
    return %c0_i32, %c0_i32_0 : i32, i32
  }
  func.func @transform_3(%arg0: i32, %arg1: i32) -> (i32, i32, i32, i32) {
    %c0_i32 = arith.constant 0 : i32
    %c0_i32_0 = arith.constant 0 : i32
    %c0_i32_1 = arith.constant 0 : i32
    return %arg0, %arg1, %c0_i32, %c0_i32_0 : i32, i32, i32, i32
  }
}

module attributes {stable_mosaic.version = 11 : i64} {
  func.func @_gated_conv_matmul_kernel(%arg0: i32, %arg1: memref<64x48xbf16, #tpu.memory_space<vmem>>, %arg2: memref<48x256xbf16, #tpu.memory_space<vmem>>, %arg3: memref<1x256xf32, #tpu.memory_space<vmem>>, %arg4: memref<64x128xf32, #tpu.memory_space<vmem>>) attributes {dimension_semantics = [#tpu.dimension_semantics<parallel>], iteration_bounds = array<i64: 8>, scalar_prefetch = 0 : i64, scratch_operands = 0 : i64, tpu.core_type = #tpu.core_type<tc>, window_params = [{transform_indices = @transform_0, window_bounds = array<i64: 64, 48>}, {pipeline_mode = #tpu.pipeline_mode<synchronous>, transform_indices = @transform_1, window_bounds = array<i64: 48, 256>}, {pipeline_mode = #tpu.pipeline_mode<synchronous>, transform_indices = @transform_2, window_bounds = array<i64: 1, 256>}, {transform_indices = @transform_3, window_bounds = array<i64: 64, 128>}]} {
    %c0 = arith.constant 0 : index
    %c0_0 = arith.constant 0 : index
    %0 = vector.load %arg1[%c0, %c0_0] : memref<64x48xbf16, #tpu.memory_space<vmem>>, vector<64x48xbf16>
    %c0_1 = arith.constant 0 : index
    %c0_2 = arith.constant 0 : index
    %1 = vector.load %arg2[%c0_1, %c0_2] : memref<48x256xbf16, #tpu.memory_space<vmem>>, vector<48x256xbf16>
    %cst = arith.constant dense<0.000000e+00> : vector<64x256xf32>
    %2 = tpu.matmul %0, %1, %cst {dimension_numbers = #tpu.dot_dimension_numbers<[1], [0], [0], [1], [0, 0, 1, 1], [], []>} : vector<64x48xbf16>, vector<48x256xbf16>, vector<64x256xf32> -> vector<64x256xf32>
    %c0_3 = arith.constant 0 : index
    %c0_4 = arith.constant 0 : index
    %3 = vector.load %arg3[%c0_3, %c0_4] : memref<1x256xf32, #tpu.memory_space<vmem>>, vector<1x256xf32>
    %4 = vector.broadcast %3 : vector<1x256xf32> to vector<64x256xf32>
    %5 = arith.addf %2, %4 : vector<64x256xf32>
    %6 = vector.extract_strided_slice %5 {offsets = [0, 0], sizes = [64, 128], strides = [1, 1]} : vector<64x256xf32> to vector<64x128xf32>
    %7 = vector.extract_strided_slice %5 {offsets = [0, 128], sizes = [64, 128], strides = [1, 1]} : vector<64x256xf32> to vector<64x128xf32>
    %8 = arith.negf %7 : vector<64x128xf32>
    %9 = math.exp %8 : vector<64x128xf32>
    %cst_5 = arith.constant 1.000000e+00 : f32
    %10 = vector.broadcast %cst_5 : f32 to vector<64x128xf32>
    %11 = arith.addf %10, %9 : vector<64x128xf32>
    %12 = arith.divf %10, %11 : vector<64x128xf32>
    %13 = arith.mulf %6, %12 : vector<64x128xf32>
    %c0_6 = arith.constant 0 : index
    %c0_7 = arith.constant 0 : index
    %14 = vector.load %arg4[%c0_6, %c0_7] : memref<64x128xf32, #tpu.memory_space<vmem>>, vector<64x128xf32>
    tpu.vector_store %arg4[%c0_6, %c0_7], %13 {strides = array<i32>} : memref<64x128xf32, #tpu.memory_space<vmem>>, vector<64x128xf32>,
    return
  }
  func.func @transform_0(%arg0: i32) -> (i32, i32) {
    %c0_i32 = arith.constant 0 : i32
    %c0_i32_0 = arith.constant 0 : i32
    return %arg0, %c0_i32 : i32, i32
  }
  func.func @transform_1(%arg0: i32) -> (i32, i32) {
    %c0_i32 = arith.constant 0 : i32
    %c0_i32_0 = arith.constant 0 : i32
    %c0_i32_1 = arith.constant 0 : i32
    return %c0_i32, %c0_i32_0 : i32, i32
  }
  func.func @transform_2(%arg0: i32) -> (i32, i32) {
    %c0_i32 = arith.constant 0 : i32
    %c0_i32_0 = arith.constant 0 : i32
    %c0_i32_1 = arith.constant 0 : i32
    return %c0_i32, %c0_i32_0 : i32, i32
  }
  func.func @transform_3(%arg0: i32) -> (i32, i32) {
    %c0_i32 = arith.constant 0 : i32
    %c0_i32_0 = arith.constant 0 : i32
    return %arg0, %c0_i32 : i32, i32
  }
}

</mosaic_0001>

<llo_original>
// kernel: tpu_custom_call.1
$region0: #{tpu_custom_call.1}
  #allocation0 [shape = 'u32[]', space=smem, size = 0x4, offset = 0x4, fixed_abs, tag = 'smem constant byte address 0x4 - core index']
  #allocation1 [shape = 'u32[144,128]{1,0:T(1,128)}', space=vmem, size = 0x12000, scoped, tag = 'internal scratch']
  %s0 = inlined_call_operand.vmem [shape: bf16[512,48], index: 0, kind: input, shape index: {}]
  %s1 = inlined_call_operand.vmem [shape: bf16[48,256], index: 1, kind: input, shape index: {}]
  %s2 = inlined_call_operand.vmem [shape: f32[1,256], index: 2, kind: input, shape index: {}]
  %s3 = inlined_call_operand.hbm [shape: f32[512,128], index: 3, kind: output, shape index: {}]
  %s4 = sld [smem:[#allocation0]]
  $region45: #{tpu_custom_call.1} parent=0
    _
  %s6 = ssub.s32 1, %s4
  %s7 = scalar_select 0, %s6, %s4
  $region1: #{tpu_custom_call.1} parent=0
    #allocation2 [shape = 'u8[65536]{0}', space=vmem, size = 0x10000, scoped, tag = 'output window, operand 0']
    #allocation3 [shape = 's32[2]{0}', space=sflag, size = 0x8, scoped, tag = 'scoped memory for tpu_custom_call.1']
    %8 = vsyncpa [#allocation3], 0
    %s9 = scalar_lea.sflag [#allocation3], 1
    %10 = vsyncpa %s9, 0
    loop: start=0, step=1, limit=10
    $region2: #{tpu_custom_call.1} parent=1 // loop_pre_header
      _
    $region3: #{tpu_custom_call.1} parent=1 // loop_header
      %s12 = sphi 0, %s16
      %p13 = scmp.ge.s32.totalorder %s12, 10
      %s22 = sphi 0, %s24
      %s25 = sphi 0, %s22
      %s26 = sphi 0, %s25
      %s42 = sphi 0, %s26
      %s46 = sphi 0, %s46
      %s48 = sphi 0, %s46
      %s49 = sphi 0, %s48
      %s63 = sphi 0, %s49
      %s67 = sphi 0, %s67
      %s69 = sphi 0, %s67
      %s70 = sphi 0, %s69
      %s84 = sphi 0, %s70
      %s90 = sphi 0, %s92
      %s93 = sphi 0, %s90
      %s94 = sphi 0, %s93
      %s110 = sphi 0, %s94
    $region4: #{tpu_custom_call.1} parent=1 // loop_header_branch
      %15 = sbr.rel (%p13) target = $region8
    $region5: #{tpu_custom_call.1} parent=1 // loop_body
      %s17 = ssub.s32 %s12, 1
      %s18 = ssub.s32 %s12, 2
      %s19 = sadd.s32 %s12, 1
      %s20 = ssub.s32 %s12, %s19
      %p21 = scmp.eq.s32.totalorder %s20, 0
      %s23 = sadd.s32 %s22, 1
      %s24 = scalar_select %p21, %s22, %s23
      %p27 = pneg %p21
      %p28 = scmp.eq.s32.totalorder %s12, 7
      %p29 = por %p27, %p28
      %p30 = scmp.ne.s32.totalorder %s22, %s25
      %p31 = scmp.eq.s32.totalorder %s12, 0
      %p32 = por %p30, %p31
      %p33 = scmp.ne.s32.totalorder %s22, %s25
      %p34 = scmp.eq.s32.totalorder %s17, 7
      %p35 = por %p33, %p34
      %p36 = scmp.ne.s32.totalorder %s25, %s26
      %p37 = scmp.eq.s32.totalorder %s17, 0
      %p38 = por %p36, %p37
      %p39 = scmp.ne.s32.totalorder %s25, %s26
      %p40 = scmp.eq.s32.totalorder %s18, 7
      %p41 = por %p39, %p40
      %p43 = scmp.ne.s32.totalorder %s26, %s42
      %p44 = scmp.eq.s32.totalorder %s18, 0
      %p45 = por %p43, %p44
      %s47 = sadd.s32 %s46, 1
      %p50 = scmp.eq.s32.totalorder %s12, 7
      %p51 = scmp.ne.s32.totalorder %s46, %s48
      %p52 = scmp.eq.s32.totalorder %s12, 0
      %p53 = por %p51, %p52
      %p54 = scmp.ne.s32.totalorder %s46, %s48
      %p55 = scmp.eq.s32.totalorder %s17, 7
      %p56 = por %p54, %p55
      %p57 = scmp.ne.s32.totalorder %s48, %s49
      %p58 = scmp.eq.s32.totalorder %s17, 0
      %p59 = por %p57, %p58
      %p60 = scmp.ne.s32.totalorder %s48, %s49
      %p61 = scmp.eq.s32.totalorder %s18, 7
      %p62 = por %p60, %p61
      %p64 = scmp.ne.s32.totalorder %s49, %s63
      %p65 = scmp.eq.s32.totalorder %s18, 0
      %p66 = por %p64, %p65
      %s68 = sadd.s32 %s67, 1
      %p71 = scmp.eq.s32.totalorder %s12, 7
      %p72 = scmp.ne.s32.totalorder %s67, %s69
      %p73 = scmp.eq.s32.totalorder %s12, 0
      %p74 = por %p72, %p73
      %p75 = scmp.ne.s32.totalorder %s67, %s69
      %p76 = scmp.eq.s32.totalorder %s17, 7
      %p77 = por %p75, %p76
      %p78 = scmp.ne.s32.totalorder %s69, %s70
      %p79 = scmp.eq.s32.totalorder %s17, 0
      %p80 = por %p78, %p79
      %p81 = scmp.ne.s32.totalorder %s69, %s70
      %p82 = scmp.eq.s32.totalorder %s18, 7
      %p83 = por %p81, %p82
      %p85 = scmp.ne.s32.totalorder %s70, %s84
      %p86 = scmp.eq.s32.totalorder %s18, 0
      %p87 = por %p85, %p86
      %s88 = ssub.s32 %s12, %s19
      %p89 = scmp.eq.s32.totalorder %s88, 0
      %s91 = sadd.s32 %s90, 1
      %s92 = scalar_select %p89, %s90, %s91
      %p95 = pneg %p89
      %p96 = scmp.eq.s32.totalorder %s12, 7
      %p97 = por %p95, %p96
      %p98 = scmp.ne.s32.totalorder %s90, %s93
      %p99 = scmp.eq.s32.totalorder %s12, 0
      %p100 = por %p98, %p99
      %p101 = scmp.ne.s32.totalorder %s90, %s93
      %p102 = scmp.eq.s32.totalorder %s17, 7
      %p103 = por %p101, %p102
      %p104 = scmp.ne.s32.totalorder %s93, %s94
      %p105 = scmp.eq.s32.totalorder %s17, 0
      %p106 = por %p104, %p105
      %p107 = scmp.ne.s32.totalorder %s93, %s94
      %p108 = scmp.eq.s32.totalorder %s18, 7
      %p109 = por %p107, %p108
      %p111 = scmp.ne.s32.totalorder %s94, %s110
      %p112 = scmp.eq.s32.totalorder %s18, 0
      %p113 = por %p111, %p112
      %p114 = scmp.le.s32.totalorder 1, %s12
      %p115 = scmp.lt.s32.totalorder %s12, 9
      %p116 = pnand %p114, %p115
      %p117 = pneg %p116
      // Predicated region
      $region9: #{tpu_custom_call.1} parent=5 // pred_check
        _
      $region10: #{tpu_custom_call.1} parent=5 // pred_check_branch
        %119 = sbr.rel (%p116) target = $region12
      $region11: #{tpu_custom_call.1} parent=5 // pred_region
        %s120 = ssub.s32 %s12, 1
        // Predicated region
        $region13: #{tpu_custom_call.1} parent=11 // pred_check
          %p121 = pneg %p59
        $region14: #{tpu_custom_call.1} parent=11 // pred_check_branch
          %123 = sbr.rel (%p121) target = $region16
        $region15: #{tpu_custom_call.1} parent=11 // pred_region
          _
        $region16: #{tpu_custom_call.1} parent=11 // pred_fallthru
          _
        // Predicated region
        $region17: #{tpu_custom_call.1} parent=11 // pred_check
          %p124 = pneg %p80
        $region18: #{tpu_custom_call.1} parent=11 // pred_check_branch
          %126 = sbr.rel (%p124) target = $region20
        $region19: #{tpu_custom_call.1} parent=11 // pred_region
          _
        $region20: #{tpu_custom_call.1} parent=11 // pred_fallthru
          _
      $region12: #{tpu_custom_call.1} parent=5 // pred_fallthru
        _
      %p127 = scmp.lt.s32.totalorder %s12, 8
      // Predicated region
      $region21: #{tpu_custom_call.1} parent=5 // pred_check
        %p128 = pneg %p127
      $region22: #{tpu_custom_call.1} parent=5 // pred_check_branch
        %130 = sbr.rel (%p128) target = $region24
      $region23: #{tpu_custom_call.1} parent=5 // pred_region
        // Predicated region
        $region25: #{tpu_custom_call.1} parent=23 // pred_check
          %p131 = pneg %p32
        $region26: #{tpu_custom_call.1} parent=23 // pred_check_branch
          %133 = sbr.rel (%p131) target = $region28
        $region27: #{tpu_custom_call.1} parent=23 // pred_region
          %s134 = smul.u32 8, %s12
          %p135 = scmp.lt.s32.totalorder %s134, 63
          %s136 = scalar_select %p135, %s134, 63
          %s137 = smul.addr %s136, 4
          %s138 = scalar_lea.vmem %s0, %s137
          %s139 = smul.u32 8, %s12
        $region28: #{tpu_custom_call.1} parent=23 // pred_fallthru
          _
      $region24: #{tpu_custom_call.1} parent=5 // pred_fallthru
        _
      %p140 = scmp.le.s32.totalorder 1, %s12
      %p141 = scmp.lt.s32.totalorder %s12, 9
      %p142 = pnand %p140, %p141
      %p143 = pneg %p142
      // Predicated region
      $region29: #{tpu_custom_call.1} parent=5 // pred_check
        _
      $region30: #{tpu_custom_call.1} parent=5 // pred_check_branch
        %145 = sbr.rel (%p142) target = $region32
      $region31: #{tpu_custom_call.1} parent=5 // pred_region
        %s146 = ssub.s32 %s12, 1
        %s147 = smul.u32 8, %s17
        %p148 = scmp.lt.s32.totalorder %s147, 63
        %s149 = scalar_select %p148, %s147, 63
        %s150 = smul.addr %s149, 4
        %s151 = scalar_lea.vmem %s0, %s150
        %p152 = pneg %p38
        %p153 = pneg %p35
        %p154 = pneg %p59
        %p155 = pneg %p56
        %p156 = pneg %p80
        %p157 = pneg %p77
        %p158 = pneg %p106
        %p159 = pneg %p103
        %s160 = sand.u32 %s93, 1
        %s161 = scalar_lea.sflag [#allocation3], %s160
        %s162 = sand.u32 %s93, 1
        %s163 = smul.addr %s162, 64
        %s164 = scalar_lea.vmem [#allocation2], %s163
        %s165 = smul.u32 8, %s17
        %p166 = scmp.lt.s32.totalorder %s165, 63
        %s167 = scalar_select %p166, %s165, 63
        %s168 = smul.addr %s167, 4
        %s169 = scalar_lea.vmem %s0, %s168
        %s170 = smul.u32 8, %s17
        %s171 = smul.u32 8, %s17
        %v173 = vld [vmem:[%s169] sm:$0xf]
        %v174 = vld [vmem:[%s169 + $0x4] sm:$0xf]
        %v175 = vld [vmem:[%s169 + $0x8] sm:$0xf]
        %v176 = vld [vmem:[%s169 + $0xc] sm:$0xf]
        %v177 = vld [vmem:[%s169 + $0x10] sm:$0xf]
        %v178 = vld [vmem:[%s169 + $0x14] sm:$0xf]
        %v179 = vld [vmem:[%s169 + $0x18] sm:$0xf]
        %v180 = vld [vmem:[%s169 + $0x1c] sm:$0xf]
        %v181 = vld [vmem:[%s1] sm:$0xff]
        %v182 = vld [vmem:[%s1 + $0x8] sm:$0xff]
        %v183 = vld [vmem:[%s1 + $0x10] sm:$0xff]
        %v184 = vld [vmem:[%s1 + $0x18] sm:$0xff]
        %v185 = vld [vmem:[%s1 + $0x20] sm:$0xff]
        %v186 = vld [vmem:[%s1 + $0x28] sm:$0xff]
        %v187 = vld [vmem:[%s2] sm:$0x3]
        %v189 = vlaneseq
        %v190 = vshrl.u32 %v189, 7
        %v191 = vsub.s32 0, %v190
        %v192 = vrot.slane %v187, %v191
        %v193 = vlaneseq
        %v194 = vshrl.u32 %v193, 7
        %v195 = vsub.s32 1, %v194
        %v196 = vrot.slane %v187, %v195
        %v207 = vunpack.c.l.b16 %v173
        %v208 = vunpack.c.l.b16 %v174
        %v209 = vunpack.c.l.b16 %v175
        %v210 = vunpack.c.l.b16 %v176
        %v211 = vunpack.c.l.b16 %v177
        %v212 = vunpack.c.l.b16 %v178
        %v213 = vunpack.c.l.b16 %v179
        %v214 = vunpack.c.l.b16 %v180
        %v215 = vpack.c.b16 %v208, %v207
        %v216 = vpack.c.b16 %v210, %v209
        %v217 = vpack.c.b16 %v212, %v211
        %v218 = vpack.c.b16 %v214, %v213
        %v225 = vunpack.c.l.b16 %v181
        %v226 = vunpack.c.h.b16 %v181
        %v227 = vunpack.c.l.b16 %v182
        %v228 = vunpack.c.h.b16 %v182
        %v229 = vunpack.c.l.b16 %v183
        %v230 = vunpack.c.h.b16 %v183
        %v231 = vunpack.c.l.b16 %v184
        %v232 = vunpack.c.h.b16 %v184
        %v233 = vunpack.c.l.b16 %v185
        %v234 = vunpack.c.h.b16 %v185
        %v235 = vunpack.c.l.b16 %v186
        %v236 = vunpack.c.h.b16 %v186
        %v237 = vpack.c.b16 %v227, %v225
        %v238 = vpack.c.b16 %v228, %v226
        %v239 = vpack.c.b16 %v231, %v229
        %v240 = vpack.c.b16 %v232, %v230
        %v241 = vpack.c.b16 %v235, %v233
        %v242 = vpack.c.b16 %v236, %v234
        %vm249 = vcmask 392192
        %v251 = vsel %vm249, %v215, 0
        %v254 = vsel %vm249, %v216, 0
        %v257 = vsel %vm249, %v217, 0
        %v260 = vsel %vm249, %v218, 0
        %262 = vmatprep.subr.bf16.mxu0 %v238
        %263 = vmatpush1.bf16.msra.mxu0 %v237
        %264 = vmatprep.subr.bf16.mxu0 %v240
        %265 = vmatpush1.bf16.msra.mxu0 %v239
        %266 = vmatprep.subr.bf16.mxu0 %v242
        %267 = vmatpush1.bf16.msra.mxu0 %v241
        %268 = vmatprep.subr.bf16.mxu0 0
        %269 = vmatpush1.bf16.msra.mxu0 0
        %270 = vmatprep.subr.bf16.mxu0 0
        %271 = vmatpush1.bf16.msra.mxu0 0
        %272 = vmatprep.subr.bf16.mxu0 0
        %273 = vmatpush1.bf16.msra.mxu0 0
        %274 = vmatprep.subr.bf16.mxu0 0
        %275 = vmatpush1.bf16.msra.mxu0 0
        %276 = vmatprep.subr.bf16.mxu0 0
        %277 = vmatpush1.bf16.msra.mxu0 0
        %278 = vmatprep.subr.bf16.mxu0 0
        %279 = vmatpush1.bf16.msra.mxu0 0
        %280 = vmatprep.subr.bf16.mxu0 0
        %281 = vmatpush1.bf16.msra.mxu0 0
        %282 = vmatprep.subr.bf16.mxu0 0
        %283 = vmatpush1.bf16.msra.mxu0 0
        %284 = vmatprep.subr.bf16.mxu0 0
        %285 = vmatpush1.bf16.msra.mxu0 0
        %286 = vmatprep.subr.bf16.mxu0 0
        %287 = vmatpush1.bf16.msra.mxu0 0
        %288 = vmatprep.subr.bf16.mxu0 0
        %289 = vmatpush1.bf16.msra.mxu0 0
        %290 = vmatprep.subr.bf16.mxu0 0
        %291 = vmatpush1.bf16.msra.mxu0 0
        %292 = vmatprep.subr.bf16.mxu0 0
        %293 = vmatpush1.bf16.msra.mxu0 0
        %294 = vmatprep.mubr.bf16.mxu0 0
        %295 = vmatmul.mubr.bf16.gmra.mrb[0].mxu0 %v251
        %v296 = vpop.f32.mrb[0].mxu0
        %v297 = vadd.f32 %v192, %v296
        %v298 = vpop.f32.mrb[0].mxu0
        %v299 = vadd.f32 %v196, %v298
        %v300 = vpop.f32.mrb[0].mxu0
        %v301 = vadd.f32 %v192, %v300
        %v302 = vpop.f32.mrb[0].mxu0
        %v303 = vadd.f32 %v196, %v302
        %304 = vmatprep.mubr.bf16.mxu0 0
        %305 = vmatmul.mubr.bf16.gmra.mrb[0].mxu0 %v254
        %v306 = vpop.f32.mrb[0].mxu0
        %v307 = vadd.f32 %v192, %v306
        %v308 = vpop.f32.mrb[0].mxu0
        %v309 = vadd.f32 %v196, %v308
        %v310 = vpop.f32.mrb[0].mxu0
        %v311 = vadd.f32 %v192, %v310
        %v312 = vpop.f32.mrb[0].mxu0
        %v313 = vadd.f32 %v196, %v312
        %314 = vmatprep.mubr.bf16.mxu0 0
        %315 = vmatmul.mubr.bf16.gmra.mrb[0].mxu0 %v257
        %v316 = vpop.f32.mrb[0].mxu0
        %v317 = vadd.f32 %v192, %v316
        %v318 = vpop.f32.mrb[0].mxu0
        %v319 = vadd.f32 %v196, %v318
        %v320 = vpop.f32.mrb[0].mxu0
        %v321 = vadd.f32 %v192, %v320
        %v322 = vpop.f32.mrb[0].mxu0
        %v323 = vadd.f32 %v196, %v322
        %324 = vmatprep.mubr.bf16.mxu0 0
        %325 = vmatmul.mubr.bf16.gmra.mrb[0].mxu0 %v260
        %v326 = vpop.f32.mrb[0].mxu0
        %v327 = vadd.f32 %v192, %v326
        %v328 = vpop.f32.mrb[0].mxu0
        %v329 = vadd.f32 %v196, %v328
        %v330 = vpop.f32.mrb[0].mxu0
        %v331 = vadd.f32 %v192, %v330
        %v332 = vpop.f32.mrb[0].mxu0
        %v333 = vadd.f32 %v196, %v332
        %334 = vdwg.mxu0
        %v335 = vxor.u32 %v299, 2147483648
        %v336 = vxor.u32 %v303, 2147483648
        %v337 = vxor.u32 %v309, 2147483648
        %v338 = vxor.u32 %v313, 2147483648
        %v339 = vxor.u32 %v319, 2147483648
        %v340 = vxor.u32 %v323, 2147483648
        %v341 = vxor.u32 %v329, 2147483648
        %v342 = vxor.u32 %v333, 2147483648
        %v343 = vmul.f32 %v335, 1.442695
        %v344 = vpow.pop %v343
        %v345 = vmul.f32 %v336, 1.442695
        %v346 = vpow.pop %v345
        %v347 = vmul.f32 %v337, 1.442695
        %v348 = vpow.pop %v347
        %v349 = vmul.f32 %v338, 1.442695
        %v350 = vpow.pop %v349
        %v351 = vmul.f32 %v339, 1.442695
        %v352 = vpow.pop %v351
        %v353 = vmul.f32 %v340, 1.442695
        %v354 = vpow.pop %v353
        %v355 = vmul.f32 %v341, 1.442695
        %v356 = vpow.pop %v355
        %v357 = vmul.f32 %v342, 1.442695
        %v358 = vpow.pop %v357
        %v359 = vadd.f32 %v344, 1.0
        %v360 = vadd.f32 %v346, 1.0
        %v361 = vadd.f32 %v348, 1.0
        %v362 = vadd.f32 %v350, 1.0
        %v363 = vadd.f32 %v352, 1.0
        %v364 = vadd.f32 %v354, 1.0
        %v365 = vadd.f32 %v356, 1.0
        %v366 = vadd.f32 %v358, 1.0
        %v367 = vrcp.pop %v359
        %v368 = vmul.f32 1.0, %v367
        %v369 = vrcp.pop %v360
        %v370 = vmul.f32 1.0, %v369
        %v371 = vrcp.pop %v361
        %v372 = vmul.f32 1.0, %v371
        %v373 = vrcp.pop %v362
        %v374 = vmul.f32 1.0, %v373
        %v375 = vrcp.pop %v363
        %v376 = vmul.f32 1.0, %v375
        %v377 = vrcp.pop %v364
        %v378 = vmul.f32 1.0, %v377
        %v379 = vrcp.pop %v365
        %v380 = vmul.f32 1.0, %v379
        %v381 = vrcp.pop %v366
        %v382 = vmul.f32 1.0, %v381
        %v383 = vmul.f32 %v297, %v368
        %v384 = vmul.f32 %v301, %v370
        %v385 = vmul.f32 %v307, %v372
        %v386 = vmul.f32 %v311, %v374
        %v387 = vmul.f32 %v317, %v376
        %v388 = vmul.f32 %v321, %v378
        %v389 = vmul.f32 %v327, %v380
        %v390 = vmul.f32 %v331, %v382
        %391 = vst [vmem:[%s164] sm:$0xff] %v383
        %392 = vst [vmem:[%s164 + $0x8] sm:$0xff] %v384
        %393 = vst [vmem:[%s164 + $0x10] sm:$0xff] %v385
        %394 = vst [vmem:[%s164 + $0x18] sm:$0xff] %v386
        %395 = vst [vmem:[%s164 + $0x20] sm:$0xff] %v387
        %396 = vst [vmem:[%s164 + $0x28] sm:$0xff] %v388
        %397 = vst [vmem:[%s164 + $0x30] sm:$0xff] %v389
        %398 = vst [vmem:[%s164 + $0x38] sm:$0xff] %v390
        %s399 = sand.u32 %s93, 1
        %s400 = scalar_lea.sflag [#allocation3], %s399
        %s401 = sand.u32 %s93, 1
        %s402 = smul.addr %s401, 64
        %s403 = scalar_lea.vmem [#allocation2], %s402
        // Predicated region
        $region33: #{tpu_custom_call.1} parent=31 // pred_check
          %p404 = pneg %p103
        $region34: #{tpu_custom_call.1} parent=31 // pred_check_branch
          %406 = sbr.rel (%p404) target = $region36
        $region35: #{tpu_custom_call.1} parent=31 // pred_region
          %s407 = smul.u32 8, %s17
          %s409 = ssub.s32 1024, 1024
          %410 = vsyncadd %s400, %s409
          %s411 = smul.addr %s407, 128
          %s412 = scalar_lea.hbm %s3, %s411
          %s413 = sshll.u32 %s403, 4
          %s414 = int_to_ptr.vmem [resolvable:$true] %s413
          %419 = dma.vmem_to_hbm [thread:$0]  %s414, 1024, %s412, %s400, 128, 128, 8
        $region36: #{tpu_custom_call.1} parent=31 // pred_fallthru
          _
      $region32: #{tpu_custom_call.1} parent=5 // pred_fallthru
        _
      %p420 = scmp.le.s32.totalorder 2, %s12
      // Predicated region
      $region37: #{tpu_custom_call.1} parent=5 // pred_check
        %p421 = pneg %p420
      $region38: #{tpu_custom_call.1} parent=5 // pred_check_branch
        %423 = sbr.rel (%p421) target = $region40
      $region39: #{tpu_custom_call.1} parent=5 // pred_region
        %s424 = ssub.s32 %s12, 2
        // Predicated region
        $region41: #{tpu_custom_call.1} parent=39 // pred_check
          %p425 = pneg %p109
        $region42: #{tpu_custom_call.1} parent=39 // pred_check_branch
          %427 = sbr.rel (%p425) target = $region44
        $region43: #{tpu_custom_call.1} parent=39 // pred_region
          %s428 = sand.u32 %s94, 1
          %s429 = scalar_lea.sflag [#allocation3], %s428
          %s430 = sand.u32 %s94, 1
          %s431 = smul.addr %s430, 64
          %s432 = scalar_lea.vmem [#allocation2], %s431
          %433 = dma.done %s429, 1024
        $region44: #{tpu_custom_call.1} parent=39 // pred_fallthru
          _
      $region40: #{tpu_custom_call.1} parent=5 // pred_fallthru
        _
    $region6: #{tpu_custom_call.1} parent=1 // loop_footer
      %s16 = sadd.s32 1, %s12
    $region7: #{tpu_custom_call.1} parent=1 // loop_footer_branch
      %11 = sbr.rel target = $region3
    $region8: #{tpu_custom_call.1} parent=1 // loop_exit
      _
    %434 = vsyncpa [#allocation3], 1
    %s435 = scalar_lea.sflag [#allocation3], 1
    %436 = vsyncpa %s435, 1

</llo_original>
